<compile_context>
chip_gen: v7x
topology: tpu7x:2x2x1
jax: 0.10.0
libtpu: 0.0.40
codegen_flags: <defaults>
</compile_context>

<pallas_src>
import jax
import jax.numpy as jnp
from jax import lax
from jax.experimental import pallas as pl
from jax.experimental.pallas import tpu as pltpu


# ----------------------------------------------------------------------------
# Generation-aware limits
# ----------------------------------------------------------------------------
def _default_vmem_limit():
    try:
        cap = pltpu.get_tpu_info().vmem_capacity_bytes
    except Exception:
        cap = 64 * 1024 * 1024
    # Leave ~25% headroom for compiler-internal scratch; clip to a safe band.
    return max(32 * 1024 * 1024, min(cap * 3 // 4, 96 * 1024 * 1024))


_VMEM_LIMIT = _default_vmem_limit()
# Budget (bytes, counting double-buffering) for keeping an operand fully
# resident in VMEM (Y in the propagate kernels, Z_cols in the decoder).
_RESIDENT_BUDGET = 8 * 1024 * 1024


# ----------------------------------------------------------------------------
# Helpers
# ----------------------------------------------------------------------------
def _round_up(x, m):
    return ((x + m - 1) // m) * m


def _pad2(x, rows, cols, dtype=None):
    r, c = x.shape
    out = jnp.pad(x, ((0, rows - r), (0, cols - c)))
    return out.astype(dtype) if dtype is not None else out


def _pick_block(n, cap, prefer_multi=False):
    """Pick a tile size (128 * 2^k) <= cap covering n; optionally ensure >=2
    blocks along the axis so both v7x TensorCores get work."""
    target = _round_up(n, 128)
    b = 128
    while b * 2 <= cap and b * 2 <= target:
        b *= 2
    if prefer_multi and target // b < 2 and b > 128:
        b //= 2
    return b


# ----------------------------------------------------------------------------
# Kernels
# ----------------------------------------------------------------------------
def feature_transform_kernel(x_ref, w_ref, y_ref):
    """Y = X @ W  (bf16 operands, f32 MXU accumulation, bf16 result)."""
    y_ref[...] = jnp.dot(
        x_ref[...], w_ref[...], preferred_element_type=jnp.float32
    ).astype(y_ref.dtype)


def _make_propagate_relu_kernel(block_k, y_resident):
    """H = relu(A @ Y + b); A tiled (rows, K), Y optionally VMEM-resident."""

    def kernel(a_ref, y_ref, b_ref, h_ref, acc_ref):
        k = pl.program_id(1)

        @pl.when(k == 0)
        def _():
            acc_ref[...] = jnp.zeros_like(acc_ref)

        if y_resident:
            start = pl.multiple_of(k * block_k, block_k)
            y = y_ref[pl.ds(start, block_k), :]
        else:
            y = y_ref[...]

        acc_ref[...] += jnp.dot(a_ref[...], y,
                                preferred_element_type=jnp.float32)

        @pl.when(k == pl.num_programs(1) - 1)
        def _():
            h_ref[...] = jnp.maximum(acc_ref[...] + b_ref[...],
                                     0.0).astype(h_ref.dtype)

    return kernel


def _make_propagate_classify_kernel(block_k, y_resident):
    """Z = A @ Y + b ; logits = Z @ Wc + bc   (classifier fused in epilogue)."""

    def kernel(a_ref, y_ref, b_ref, wc_ref, bc_ref, z_ref, out_ref, acc_ref):
        k = pl.program_id(1)

        @pl.when(k == 0)
        def _():
            acc_ref[...] = jnp.zeros_like(acc_ref)

        if y_resident:
            start = pl.multiple_of(k * block_k, block_k)
            y = y_ref[pl.ds(start, block_k), :]
        else:
            y = y_ref[...]

        acc_ref[...] += jnp.dot(a_ref[...], y,
                                preferred_element_type=jnp.float32)

        @pl.when(k == pl.num_programs(1) - 1)
        def _():
            z = acc_ref[...] + b_ref[...]
            z_ref[...] = z.astype(z_ref.dtype)
            logits = jnp.dot(z.astype(wc_ref.dtype), wc_ref[...],
                             preferred_element_type=jnp.float32) + bc_ref[...]
            out_ref[...] = logits.astype(out_ref.dtype)

    return kernel


def _make_decoder_kernel(block_c, z_resident):
    """InnerProductDecoder.forward_all tile: sigmoid(Z_rows @ Z_cols^T).

    Contraction on the last dim of BOTH operands -> no explicit transpose is
    materialized.  Z_cols may be the full resident latent (sliced in-kernel).
    """

    def kernel(zr_ref, zc_ref, adj_ref):
        if z_resident:
            j = pl.program_id(1)
            start = pl.multiple_of(j * block_c, block_c)
            zc = zc_ref[pl.ds(start, block_c), :]
        else:
            zc = zc_ref[...]
        logits = lax.dot_general(
            zr_ref[...], zc,
            dimension_numbers=(((1,), (1,)), ((), ())),
            preferred_element_type=jnp.float32)
        adj_ref[...] = jax.nn.sigmoid(logits).astype(adj_ref.dtype)

    return kernel


# ----------------------------------------------------------------------------
# pallas_call wrappers
# ----------------------------------------------------------------------------
def _feature_transform(x_p, w_p, block_m):
    n_p, f_p = x_p.shape
    h_p = w_p.shape[1]
    return pl.pallas_call(
        feature_transform_kernel,
        out_shape=jax.ShapeDtypeStruct((n_p, h_p), jnp.bfloat16),
        grid=(n_p // block_m,),
        in_specs=[pl.BlockSpec((block_m, f_p), lambda i: (i, 0)),
                  pl.BlockSpec((f_p, h_p), lambda i: (0, 0))],
        out_specs=pl.BlockSpec((block_m, h_p), lambda i: (i, 0)),
        compiler_params=pltpu.CompilerParams(
            dimension_semantics=("parallel",),
            vmem_limit_bytes=_VMEM_LIMIT),
    )(x_p, w_p)


def _propagate_relu(a_p, y_p, b_p, block_m, block_k):
    n_p = a_p.shape[0]
    h_p = y_p.shape[1]
    y_resident = 2 * n_p * h_p * y_p.dtype.itemsize <= _RESIDENT_BUDGET
    y_spec = (pl.BlockSpec((n_p, h_p), lambda i, k: (0, 0)) if y_resident
              else pl.BlockSpec((block_k, h_p), lambda i, k: (k, 0)))
    return pl.pallas_call(
        _make_propagate_relu_kernel(block_k, y_resident),
        out_shape=jax.ShapeDtypeStruct((n_p, h_p), jnp.bfloat16),
        grid=(n_p // block_m, n_p // block_k),
        in_specs=[pl.BlockSpec((block_m, block_k), lambda i, k: (i, k)),
                  y_spec,
                  pl.BlockSpec((1, h_p), lambda i, k: (0, 0))],
        out_specs=pl.BlockSpec((block_m, h_p), lambda i, k: (i, 0)),
        scratch_shapes=[pltpu.VMEM((block_m, h_p), jnp.float32)],
        compiler_params=pltpu.CompilerParams(
            dimension_semantics=("parallel", "arbitrary"),
            vmem_limit_bytes=_VMEM_LIMIT),
    )(a_p, y_p, b_p)


def _propagate_classify(a_p, y_p, b_p, wc_p, bc_p, block_m, block_k):
    n_p = a_p.shape[0]
    h_p = y_p.shape[1]
    o_p = wc_p.shape[1]
    y_resident = 2 * n_p * h_p * y_p.dtype.itemsize <= _RESIDENT_BUDGET
    y_spec = (pl.BlockSpec((n_p, h_p), lambda i, k: (0, 0)) if y_resident
              else pl.BlockSpec((block_k, h_p), lambda i, k: (k, 0)))
    return pl.pallas_call(
        _make_propagate_classify_kernel(block_k, y_resident),
        out_shape=(jax.ShapeDtypeStruct((n_p, h_p), jnp.bfloat16),
                   jax.ShapeDtypeStruct((n_p, o_p), jnp.float32)),
        grid=(n_p // block_m, n_p // block_k),
        in_specs=[pl.BlockSpec((block_m, block_k), lambda i, k: (i, k)),
                  y_spec,
                  pl.BlockSpec((1, h_p), lambda i, k: (0, 0)),
                  pl.BlockSpec((h_p, o_p), lambda i, k: (0, 0)),
                  pl.BlockSpec((1, o_p), lambda i, k: (0, 0))],
        out_specs=(pl.BlockSpec((block_m, h_p), lambda i, k: (i, 0)),
                   pl.BlockSpec((block_m, o_p), lambda i, k: (i, 0))),
        scratch_shapes=[pltpu.VMEM((block_m, h_p), jnp.float32)],
        compiler_params=pltpu.CompilerParams(
            dimension_semantics=("parallel", "arbitrary"),
            vmem_limit_bytes=_VMEM_LIMIT),
    )(a_p, y_p, b_p, wc_p, bc_p)


def gae_forward(a_norm, x, params, *, block_m=None, block_k=None):
    """GAE.forward: classifier(encoder(x, edge_index)). Returns (logits, z)."""
    n, fin = x.shape
    hid = params["w2"].shape[1]
    out_dim = params["wc"].shape[1]

    bm = block_m or _pick_block(n, 1024, prefer_multi=True)  # parallel rows
    bk = block_k or _pick_block(n, 1024)                      # reduction (K)
    n_p = _round_up(n, max(bm, bk))
    f_p = _round_up(fin, 128)
    h_p = _round_up(hid, 128)
    o_p = _round_up(out_dim, 128)

    bf = jnp.bfloat16
    # Fold eval-mode BatchNorm into the layer-1 weight / bias
    # (per-output-column scale commutes with the left A @ (.) matmul).
    s1, t1 = params["bn1_scale"], params["bn1_shift"]
    w1_folded = params["w1"] * s1
    b1_folded = params["b1"] * s1 + t1

    a_p = _pad2(a_norm, n_p, n_p, bf)
    x_p = _pad2(x, n_p, f_p, bf)
    w1_p = _pad2(w1_folded, f_p, h_p, bf)
    b1_p = _pad2(b1_folded, 1, h_p, jnp.float32)
    w2_p = _pad2(params["w2"], h_p, h_p, bf)
    b2_p = _pad2(params["b2"], 1, h_p, jnp.float32)
    wc_p = _pad2(params["wc"], h_p, o_p, bf)
    bc_p = _pad2(params["bc"], 1, o_p, jnp.float32)

    # Layer 1: h1 = relu(BN(A @ (X @ W1) + b1))   (BN folded)
    y1 = _feature_transform(x_p, w1_p, bm)
    h1 = _propagate_relu(a_p, y1, b1_p, bm, bk)
    # TODO(synk): dropout(p=0.5) between layers omitted (eval/inference semantics).

    # Layer 2 (last_activation=False) fused with the linear classifier.
    y2 = _feature_transform(h1, w2_p, bm)
    z_p, logits_p = _propagate_classify(a_p, y2, b2_p, wc_p, bc_p, bm, bk)

    return logits_p[:n, :out_dim], z_p[:n, :hid]


def decode_all(z, *, block_rows=None, block_cols=None):
    """InnerProductDecoder.forward_all: sigmoid(Z @ Z^T), tiled, bf16 output."""
    n, hid = z.shape
    h_p = _round_up(hid, 128)
    bm = block_rows or _pick_block(n, 1024, prefer_multi=True)
    bc = block_cols or _pick_block(n, 1024)
    n_p = _round_up(n, max(bm, bc))
    z_p = _pad2(z, n_p, h_p, jnp.bfloat16)

    z_resident = 2 * n_p * h_p * 2 <= _RESIDENT_BUDGET
    zc_spec = (pl.BlockSpec((n_p, h_p), lambda i, j: (0, 0)) if z_resident
               else pl.BlockSpec((bc, h_p), lambda i, j: (j, 0)))

    # TODO(synk): exploit symmetry (only i<=j tiles + mirror) via a flattened
    # 1-D grid driven by PrefetchScalarGridSpec index arrays.
    adj = pl.pallas_call(
        _make_decoder_kernel(bc, z_resident),
        out_shape=jax.ShapeDtypeStruct((n_p, n_p), jnp.bfloat16),
        grid=(n_p // bm, n_p // bc),
        in_specs=[pl.BlockSpec((bm, h_p), lambda i, j: (i, 0)), zc_spec],
        out_specs=pl.BlockSpec((bm, bc), lambda i, j: (i, j)),
        compiler_params=pltpu.CompilerParams(
            dimension_semantics=("parallel", "parallel"),
            vmem_limit_bytes=_VMEM_LIMIT),
    )(z_p, z_p)
    return adj[:n, :n]


# ----------------------------------------------------------------------------
# Glue: adjacency normalization, parameter init, plain-JAX reference
# ----------------------------------------------------------------------------
def build_normalized_adjacency(edge_index, num_nodes):
    """Dense D^-1/2 (A + I) D^-1/2 from an edge_index [2, E]."""
    src, dst = edge_index[0], edge_index[1]
    adj = jnp.zeros((num_nodes, num_nodes), jnp.float32)
    adj = adj.at[src, dst].set(1.0)
    adj = jnp.maximum(adj, adj.T)                      # symmetrize
    adj = adj + jnp.eye(num_nodes, dtype=jnp.float32)  # self loops
    deg = adj.sum(axis=1)
    d_inv_sqrt = 1.0 / jnp.sqrt(jnp.maximum(deg, 1e-12))
    return adj * d_inv_sqrt[:, None] * d_inv_sqrt[None, :]


def init_params(key, input_dim, hidden, output_dim):
    ks = jax.random.split(key, 6)

    def glorot(k, fan_in, fan_out):
        lim = jnp.sqrt(6.0 / (fan_in + fan_out))
        return jax.random.uniform(k, (fan_in, fan_out), jnp.float32, -lim, lim)

    eps = 1e-5
    gamma = jnp.ones((1, hidden), jnp.float32)
    beta = jnp.zeros((1, hidden), jnp.float32)
    run_mean = jnp.zeros((1, hidden), jnp.float32)
    run_var = jnp.ones((1, hidden), jnp.float32)
    bn_scale = gamma / jnp.sqrt(run_var + eps)
    bn_shift = beta - run_mean * bn_scale

    return {
        "w1": glorot(ks[0], input_dim, hidden),
        "b1": jnp.zeros((1, hidden), jnp.float32),
        "bn1_scale": bn_scale,
        "bn1_shift": bn_shift,
        "w2": glorot(ks[1], hidden, hidden),
        "b2": jnp.zeros((1, hidden), jnp.float32),
        "wc": glorot(ks[2], hidden, output_dim),
        "bc": jax.random.uniform(ks[3], (1, output_dim), jnp.float32,
                                 -1.0 / jnp.sqrt(hidden), 1.0 / jnp.sqrt(hidden)),
    }


def _q(v):
    """Emulate the kernel's bf16 operand cast (values only; math stays f32)."""
    return v.astype(jnp.bfloat16).astype(jnp.float32)


def ref_forward(a, x, params):
    """Plain-JAX reference matching the kernel's bf16 cast points."""
    s1, t1 = params["bn1_scale"], params["bn1_shift"]
    a_q = _q(a)
    y1 = _q(_q(x) @ _q(params["w1"] * s1))
    h1 = _q(jnp.maximum(a_q @ y1 + (params["b1"] * s1 + t1), 0.0))
    y2 = _q(h1 @ _q(params["w2"]))
    z = a_q @ y2 + params["b2"]
    logits = _q(z) @ _q(params["wc"]) + params["bc"]
    adj = jax.nn.sigmoid(_q(z) @ _q(z).T)
    return logits, z, adj


# ----------------------------------------------------------------------------
if __name__ == "__main__":
    key = jax.random.PRNGKey(0)
    k_x, k_e, k_p = jax.random.split(key, 3)

    # Small shapes consistent with the module: N nodes, input_dim, hidden, out.
    N, INPUT_DIM, HIDDEN, OUTPUT_DIM, E = 256, 48, 64, 16, 1024

    x = jax.random.normal(k_x, (N, INPUT_DIM), jnp.float32)
    edge_index = jax.random.randint(k_e, (2, E), 0, N, jnp.int32)

    a_norm = build_normalized_adjacency(edge_index, N)
    params = init_params(k_p, INPUT_DIM, HIDDEN, OUTPUT_DIM)

    # GAE.forward: classifier(encoder(x, edge_index))
    logits, z = gae_forward(a_norm, x, params)
    # InnerProductDecoder.forward_all on the encoder latent
    adj_prob = decode_all(z)
    jax.block_until_ready((logits, z, adj_prob))

    # Reference check (pure JAX)
    ref_logits, ref_z, ref_adj = ref_forward(a_norm, x, params)

    assert logits.shape == (N, OUTPUT_DIM)
    assert z.shape == (N, HIDDEN)
    assert adj_prob.shape == (N, N)
    assert bool(jnp.all(jnp.isfinite(logits)))
    assert bool(jnp.all((adj_prob >= 0.0) & (adj_prob <= 1.0)))
    assert bool(jnp.allclose(logits, ref_logits, atol=5e-2, rtol=5e-2))
    assert bool(jnp.allclose(z.astype(jnp.float32), ref_z, atol=5e-2, rtol=5e-2))
    assert bool(jnp.allclose(adj_prob.astype(jnp.float32), ref_adj,
                             atol=5e-2, rtol=5e-2))

    print("KERNEL_OK")
</pallas_src>

<mosaic_0001>
module attributes {stable_mosaic.version = 11 : i64} {
  func.func @feature_transform_kernel(%arg0: i32, %arg1: memref<128x128xbf16, #tpu.memory_space<vmem>>, %arg2: memref<128x128xbf16, #tpu.memory_space<vmem>>, %arg3: memref<128x128xbf16, #tpu.memory_space<vmem>>) attributes {dimension_semantics = [#tpu.dimension_semantics<parallel>], iteration_bounds = array<i64: 2>, scalar_prefetch = 0 : i64, scratch_operands = 0 : i64, tpu.core_type = #tpu.core_type<tc>, window_params = [{transform_indices = @transform_0, window_bounds = array<i64: 128, 128>}, {pipeline_mode = #tpu.pipeline_mode<synchronous>, transform_indices = @transform_1, window_bounds = array<i64: 128, 128>}, {transform_indices = @transform_2, window_bounds = array<i64: 128, 128>}]} {
    %c0 = arith.constant 0 : index
    %c0_0 = arith.constant 0 : index
    %0 = vector.load %arg1[%c0, %c0_0] : memref<128x128xbf16, #tpu.memory_space<vmem>>, vector<128x128xbf16>
    %c0_1 = arith.constant 0 : index
    %c0_2 = arith.constant 0 : index
    %1 = vector.load %arg2[%c0_1, %c0_2] : memref<128x128xbf16, #tpu.memory_space<vmem>>, vector<128x128xbf16>
    %cst = arith.constant dense<0.000000e+00> : vector<128x128xf32>
    %2 = tpu.matmul %0, %1, %cst {dimension_numbers = #tpu.dot_dimension_numbers<[1], [0], [0], [1], [0, 0, 1, 1], [], []>} : vector<128x128xbf16>, vector<128x128xbf16>, vector<128x128xf32> -> vector<128x128xf32>
    %3 = arith.truncf %2 : vector<128x128xf32> to vector<128x128xbf16>
    %c0_3 = arith.constant 0 : index
    %c0_4 = arith.constant 0 : index
    %4 = vector.load %arg3[%c0_3, %c0_4] : memref<128x128xbf16, #tpu.memory_space<vmem>>, vector<128x128xbf16>
    tpu.vector_store %arg3[%c0_3, %c0_4], %3 {strides = array<i32>} : memref<128x128xbf16, #tpu.memory_space<vmem>>, vector<128x128xbf16>,
    return
  }
  func.func @transform_0(%arg0: i32) -> (i32, i32) {
    %c0_i32 = arith.constant 0 : i32
    %c0_i32_0 = arith.constant 0 : i32
    return %arg0, %c0_i32 : i32, i32
  }
  func.func @transform_1(%arg0: i32) -> (i32, i32) {
    %c0_i32 = arith.constant 0 : i32
    %c0_i32_0 = arith.constant 0 : i32
    %c0_i32_1 = arith.constant 0 : i32
    return %c0_i32, %c0_i32_0 : i32, i32
  }
  func.func @transform_2(%arg0: i32) -> (i32, i32) {
    %c0_i32 = arith.constant 0 : i32
    %c0_i32_0 = arith.constant 0 : i32
    return %arg0, %c0_i32 : i32, i32
  }
}

</mosaic_0001>

<llo_original>
// kernel: tpu_custom_call.1
$region0: #{tpu_custom_call.1}
  #allocation0 [shape = 'u32[]', space=smem, size = 0x4, offset = 0x4, fixed_abs, tag = 'smem constant byte address 0x4 - core index']
  #allocation1 [shape = 'u32[144,128]{1,0:T(1,128)}', space=vmem, size = 0x12000, scoped, tag = 'internal scratch']
  %s0 = inlined_call_operand.hbm [shape: bf16[256,128], index: 0, kind: input, shape index: {}]
  %s1 = inlined_call_operand.hbm [shape: bf16[128,128], index: 1, kind: input, shape index: {}]
  %s2 = inlined_call_operand.hbm [shape: bf16[256,128], index: 2, kind: output, shape index: {}]
  %s3 = sld [smem:[#allocation0]]
  $region49: #{tpu_custom_call.1} parent=0
    _
  %s5 = ssub.s32 1, %s3
  %s6 = scalar_select 0, %s5, %s3
  $region1: #{tpu_custom_call.1} parent=0
    #allocation2 [shape = 'u8[65536]{0}', space=vmem, size = 0x10000, scoped, tag = 'input window, operand 0']
    #allocation3 [shape = 's32[2]{0}', space=sflag, size = 0x8, scoped, tag = 'scoped memory for tpu_custom_call.1']
    #allocation4 [shape = 's32[2]{0}', space=sflag, size = 0x8, scoped, tag = 'scoped memory for tpu_custom_call.1']
    #allocation5 [shape = 'u8[32768]{0}', space=vmem, size = 0x8000, scoped, tag = 'input window, operand 1, single buffered']
    #allocation6 [shape = 's32[1]{0}', space=sflag, size = 0x4, scoped, tag = 'scoped memory for tpu_custom_call.1']
    #allocation7 [shape = 'u8[65536]{0}', space=vmem, size = 0x10000, scoped, tag = 'output window, operand 0']
    %7 = vsyncpa [#allocation3], 0
    %s8 = scalar_lea.sflag [#allocation3], 1
    %9 = vsyncpa %s8, 0
    %10 = vsyncpa [#allocation6], 0
    %11 = vsyncpa [#allocation4], 0
    %s12 = scalar_lea.sflag [#allocation4], 1
    %13 = vsyncpa %s12, 0
    loop: start=0, step=1, limit=4
    $region2: #{tpu_custom_call.1} parent=1 // loop_pre_header
      _
    $region3: #{tpu_custom_call.1} parent=1 // loop_header
      %s15 = sphi 0, %s19
      %p16 = scmp.ge.s32.totalorder %s15, 4
      %s25 = sphi 0, %s27
      %s28 = sphi 0, %s25
      %s29 = sphi 0, %s28
      %s45 = sphi 0, %s29
      %s49 = sphi 0, %s49
      %s51 = sphi 0, %s49
      %s52 = sphi 0, %s51
      %s66 = sphi 0, %s52
      %s72 = sphi 0, %s74
      %s75 = sphi 0, %s72
      %s76 = sphi 0, %s75
      %s92 = sphi 0, %s76
    $region4: #{tpu_custom_call.1} parent=1 // loop_header_branch
      %18 = sbr.rel (%p16) target = $region8
    $region5: #{tpu_custom_call.1} parent=1 // loop_body
      %s20 = ssub.s32 %s15, 1
      %s21 = ssub.s32 %s15, 2
      %s22 = sadd.s32 %s15, 1
      %s23 = ssub.s32 %s15, %s22
      %p24 = scmp.eq.s32.totalorder %s23, 0
      %s26 = sadd.s32 %s25, 1
      %s27 = scalar_select %p24, %s25, %s26
      %p30 = pneg %p24
      %p31 = scmp.eq.s32.totalorder %s15, 1
      %p32 = por %p30, %p31
      %p33 = scmp.ne.s32.totalorder %s25, %s28
      %p34 = scmp.eq.s32.totalorder %s15, 0
      %p35 = por %p33, %p34
      %p36 = scmp.ne.s32.totalorder %s25, %s28
      %p37 = scmp.eq.s32.totalorder %s20, 1
      %p38 = por %p36, %p37
      %p39 = scmp.ne.s32.totalorder %s28, %s29
      %p40 = scmp.eq.s32.totalorder %s20, 0
      %p41 = por %p39, %p40
      %p42 = scmp.ne.s32.totalorder %s28, %s29
      %p43 = scmp.eq.s32.totalorder %s21, 1
      %p44 = por %p42, %p43
      %p46 = scmp.ne.s32.totalorder %s29, %s45
      %p47 = scmp.eq.s32.totalorder %s21, 0
      %p48 = por %p46, %p47
      %s50 = sadd.s32 %s49, 1
      %p53 = scmp.eq.s32.totalorder %s15, 1
      %p54 = scmp.ne.s32.totalorder %s49, %s51
      %p55 = scmp.eq.s32.totalorder %s15, 0
      %p56 = por %p54, %p55
      %p57 = scmp.ne.s32.totalorder %s49, %s51
      %p58 = scmp.eq.s32.totalorder %s20, 1
      %p59 = por %p57, %p58
      %p60 = scmp.ne.s32.totalorder %s51, %s52
      %p61 = scmp.eq.s32.totalorder %s20, 0
      %p62 = por %p60, %p61
      %p63 = scmp.ne.s32.totalorder %s51, %s52
      %p64 = scmp.eq.s32.totalorder %s21, 1
      %p65 = por %p63, %p64
      %p67 = scmp.ne.s32.totalorder %s52, %s66
      %p68 = scmp.eq.s32.totalorder %s21, 0
      %p69 = por %p67, %p68
      %s70 = ssub.s32 %s15, %s22
      %p71 = scmp.eq.s32.totalorder %s70, 0
      %s73 = sadd.s32 %s72, 1
      %s74 = scalar_select %p71, %s72, %s73
      %p77 = pneg %p71
      %p78 = scmp.eq.s32.totalorder %s15, 1
      %p79 = por %p77, %p78
      %p80 = scmp.ne.s32.totalorder %s72, %s75
      %p81 = scmp.eq.s32.totalorder %s15, 0
      %p82 = por %p80, %p81
      %p83 = scmp.ne.s32.totalorder %s72, %s75
      %p84 = scmp.eq.s32.totalorder %s20, 1
      %p85 = por %p83, %p84
      %p86 = scmp.ne.s32.totalorder %s75, %s76
      %p87 = scmp.eq.s32.totalorder %s20, 0
      %p88 = por %p86, %p87
      %p89 = scmp.ne.s32.totalorder %s75, %s76
      %p90 = scmp.eq.s32.totalorder %s21, 1
      %p91 = por %p89, %p90
      %p93 = scmp.ne.s32.totalorder %s76, %s92
      %p94 = scmp.eq.s32.totalorder %s21, 0
      %p95 = por %p93, %p94
      %p96 = scmp.le.s32.totalorder 1, %s15
      %p97 = scmp.lt.s32.totalorder %s15, 3
      %p98 = pnand %p96, %p97
      %p99 = pneg %p98
      // Predicated region
      $region9: #{tpu_custom_call.1} parent=5 // pred_check
        _
      $region10: #{tpu_custom_call.1} parent=5 // pred_check_branch
        %101 = sbr.rel (%p98) target = $region12
      $region11: #{tpu_custom_call.1} parent=5 // pred_region
        %s102 = ssub.s32 %s15, 1
        // Predicated region
        $region13: #{tpu_custom_call.1} parent=11 // pred_check
          %p103 = pneg %p62
        $region14: #{tpu_custom_call.1} parent=11 // pred_check_branch
          %105 = sbr.rel (%p103) target = $region16
        $region15: #{tpu_custom_call.1} parent=11 // pred_region
          %s107 = ssub.s32 1024, 1024
          %108 = vsyncadd [#allocation6], %s107
          %s109 = sshll.u32 [#allocation5], 4
          %s110 = int_to_ptr.vmem [resolvable:$true] %s109
          %115 = dma.hbm_to_vmem [thread:$0]  %s1, 1024, %s110, [#allocation6], 64, 64, 4
        $region16: #{tpu_custom_call.1} parent=11 // pred_fallthru
          _
      $region12: #{tpu_custom_call.1} parent=5 // pred_fallthru
        _
      %p116 = scmp.lt.s32.totalorder %s15, 2
      // Predicated region
      $region17: #{tpu_custom_call.1} parent=5 // pred_check
        %p117 = pneg %p116
      $region18: #{tpu_custom_call.1} parent=5 // pred_check_branch
        %119 = sbr.rel (%p117) target = $region20
      $region19: #{tpu_custom_call.1} parent=5 // pred_region
        // Predicated region
        $region21: #{tpu_custom_call.1} parent=19 // pred_check
          %p120 = pneg %p35
        $region22: #{tpu_custom_call.1} parent=19 // pred_check_branch
          %122 = sbr.rel (%p120) target = $region24
        $region23: #{tpu_custom_call.1} parent=19 // pred_region
          %s123 = sand.u32 %s25, 1
          %s124 = scalar_lea.sflag [#allocation3], %s123
          %s125 = sand.u32 %s25, 1
          %s126 = smul.addr %s125, 64
          %s127 = scalar_lea.vmem [#allocation2], %s126
          %s128 = smul.u32 16, %s15
          %s130 = ssub.s32 1024, 1024
          %131 = vsyncadd %s124, %s130
          %s132 = smul.addr %s128, 64
          %s133 = scalar_lea.hbm %s0, %s132
          %s134 = sshll.u32 %s127, 4
          %s135 = int_to_ptr.vmem [resolvable:$true] %s134
          %140 = dma.hbm_to_vmem [thread:$0]  %s133, 1024, %s135, %s124, 64, 64, 4
        $region24: #{tpu_custom_call.1} parent=19 // pred_fallthru
          _
      $region20: #{tpu_custom_call.1} parent=5 // pred_fallthru
        _
      %p141 = scmp.le.s32.totalorder 1, %s15
      %p142 = scmp.lt.s32.totalorder %s15, 3
      %p143 = pnand %p141, %p142
      %p144 = pneg %p143
      // Predicated region
      $region25: #{tpu_custom_call.1} parent=5 // pred_check
        _
      $region26: #{tpu_custom_call.1} parent=5 // pred_check_branch
        %146 = sbr.rel (%p143) target = $region28
      $region27: #{tpu_custom_call.1} parent=5 // pred_region
        %s147 = ssub.s32 %s15, 1
        %s148 = sand.u32 %s28, 1
        %s149 = scalar_lea.sflag [#allocation3], %s148
        %s150 = sand.u32 %s28, 1
        %s151 = smul.addr %s150, 64
        %s152 = scalar_lea.vmem [#allocation2], %s151
        // Predicated region
        $region29: #{tpu_custom_call.1} parent=27 // pred_check
          %p153 = pneg %p41
        $region30: #{tpu_custom_call.1} parent=27 // pred_check_branch
          %155 = sbr.rel (%p153) target = $region32
        $region31: #{tpu_custom_call.1} parent=27 // pred_region
          %156 = dma.done %s149, 1024
        $region32: #{tpu_custom_call.1} parent=27 // pred_fallthru
          _
        // Predicated region
        $region33: #{tpu_custom_call.1} parent=27 // pred_check
          %p157 = pneg %p62
        $region34: #{tpu_custom_call.1} parent=27 // pred_check_branch
          %159 = sbr.rel (%p157) target = $region36
        $region35: #{tpu_custom_call.1} parent=27 // pred_region
          %160 = dma.done [#allocation6], 1024
        $region36: #{tpu_custom_call.1} parent=27 // pred_fallthru
          _
        %s161 = sand.u32 %s28, 1
        %s162 = scalar_lea.sflag [#allocation3], %s161
        %s163 = sand.u32 %s28, 1
        %s164 = smul.addr %s163, 64
        %s165 = scalar_lea.vmem [#allocation2], %s164
        %p166 = pneg %p41
        %p167 = pneg %p38
        %p168 = pneg %p62
        %p169 = pneg %p59
        %p170 = pneg %p88
        %p171 = pneg %p85
        %s172 = sand.u32 %s75, 1
        %s173 = scalar_lea.sflag [#allocation4], %s172
        %s174 = sand.u32 %s75, 1
        %s175 = smul.addr %s174, 64
        %s176 = scalar_lea.vmem [#allocation7], %s175
        %s177 = smul.u32 16, %s20
        %s178 = smul.u32 16, %s20
        %v180 = vld [vmem:[%s152] sm:$0xf]
        %v181 = vld [vmem:[%s152 + $0x4] sm:$0xf]
        %v182 = vld [vmem:[%s152 + $0x8] sm:$0xf]
        %v183 = vld [vmem:[%s152 + $0xc] sm:$0xf]
        %v184 = vld [vmem:[%s152 + $0x10] sm:$0xf]
        %v185 = vld [vmem:[%s152 + $0x14] sm:$0xf]
        %v186 = vld [vmem:[%s152 + $0x18] sm:$0xf]
        %v187 = vld [vmem:[%s152 + $0x1c] sm:$0xf]
        %v188 = vld [vmem:[%s152 + $0x20] sm:$0xf]
        %v189 = vld [vmem:[%s152 + $0x24] sm:$0xf]
        %v190 = vld [vmem:[%s152 + $0x28] sm:$0xf]
        %v191 = vld [vmem:[%s152 + $0x2c] sm:$0xf]
        %v192 = vld [vmem:[%s152 + $0x30] sm:$0xf]
        %v193 = vld [vmem:[%s152 + $0x34] sm:$0xf]
        %v194 = vld [vmem:[%s152 + $0x38] sm:$0xf]
        %v195 = vld [vmem:[%s152 + $0x3c] sm:$0xf]
        %v196 = vld [vmem:[#allocation5] sm:$0xf]
        %v197 = vld [vmem:[#allocation5 + $0x4] sm:$0xf]
        %v198 = vld [vmem:[#allocation5 + $0x8] sm:$0xf]
        %v199 = vld [vmem:[#allocation5 + $0xc] sm:$0xf]
        %v200 = vld [vmem:[#allocation5 + $0x10] sm:$0xf]
        %v201 = vld [vmem:[#allocation5 + $0x14] sm:$0xf]
        %v202 = vld [vmem:[#allocation5 + $0x18] sm:$0xf]
        %v203 = vld [vmem:[#allocation5 + $0x1c] sm:$0xf]
        %v204 = vld [vmem:[#allocation5 + $0x20] sm:$0xf]
        %v205 = vld [vmem:[#allocation5 + $0x24] sm:$0xf]
        %v206 = vld [vmem:[#allocation5 + $0x28] sm:$0xf]
        %v207 = vld [vmem:[#allocation5 + $0x2c] sm:$0xf]
        %v208 = vld [vmem:[#allocation5 + $0x30] sm:$0xf]
        %v209 = vld [vmem:[#allocation5 + $0x34] sm:$0xf]
        %v210 = vld [vmem:[#allocation5 + $0x38] sm:$0xf]
        %v211 = vld [vmem:[#allocation5 + $0x3c] sm:$0xf]
        %v228 = vunpack.c.l.b16 %v180
        %v229 = vunpack.c.l.b16 %v181
        %v230 = vunpack.c.l.b16 %v182
        %v231 = vunpack.c.l.b16 %v183
        %v232 = vunpack.c.l.b16 %v184
        %v233 = vunpack.c.l.b16 %v185
        %v234 = vunpack.c.l.b16 %v186
        %v235 = vunpack.c.l.b16 %v187
        %v236 = vunpack.c.l.b16 %v188
        %v237 = vunpack.c.l.b16 %v189
        %v238 = vunpack.c.l.b16 %v190
        %v239 = vunpack.c.l.b16 %v191
        %v240 = vunpack.c.l.b16 %v192
        %v241 = vunpack.c.l.b16 %v193
        %v242 = vunpack.c.l.b16 %v194
        %v243 = vunpack.c.l.b16 %v195
        %v244 = vpack.c.b16 %v229, %v228
        %v245 = vpack.c.b16 %v231, %v230
        %v246 = vpack.c.b16 %v233, %v232
        %v247 = vpack.c.b16 %v235, %v234
        %v248 = vpack.c.b16 %v237, %v236
        %v249 = vpack.c.b16 %v239, %v238
        %v250 = vpack.c.b16 %v241, %v240
        %v251 = vpack.c.b16 %v243, %v242
        %v276 = vunpack.c.l.b16 %v196
        %v277 = vunpack.c.l.b16 %v197
        %v278 = vunpack.c.l.b16 %v198
        %v279 = vunpack.c.l.b16 %v199
        %v280 = vunpack.c.l.b16 %v200
        %v281 = vunpack.c.l.b16 %v201
        %v282 = vunpack.c.l.b16 %v202
        %v283 = vunpack.c.l.b16 %v203
        %v284 = vunpack.c.l.b16 %v204
        %v285 = vunpack.c.l.b16 %v205
        %v286 = vunpack.c.l.b16 %v206
        %v287 = vunpack.c.l.b16 %v207
        %v288 = vunpack.c.l.b16 %v208
        %v289 = vunpack.c.l.b16 %v209
        %v290 = vunpack.c.l.b16 %v210
        %v291 = vunpack.c.l.b16 %v211
        %v292 = vpack.c.b16 %v277, %v276
        %v293 = vpack.c.b16 %v279, %v278
        %v294 = vpack.c.b16 %v281, %v280
        %v295 = vpack.c.b16 %v283, %v282
        %v296 = vpack.c.b16 %v285, %v284
        %v297 = vpack.c.b16 %v287, %v286
        %v298 = vpack.c.b16 %v289, %v288
        %v299 = vpack.c.b16 %v291, %v290
        %308 = vmatprep.subr.bf16.mxu0 0
        %309 = vmatpush1.bf16.msra.mxu0 %v292
        %310 = vmatprep.subr.bf16.mxu0 0
        %311 = vmatpush1.bf16.msra.mxu0 %v293
        %312 = vmatprep.subr.bf16.mxu0 0
        %313 = vmatpush1.bf16.msra.mxu0 %v294
        %314 = vmatprep.subr.bf16.mxu0 0
        %315 = vmatpush1.bf16.msra.mxu0 %v295
        %316 = vmatprep.subr.bf16.mxu0 0
        %317 = vmatpush1.bf16.msra.mxu0 %v296
        %318 = vmatprep.subr.bf16.mxu0 0
        %319 = vmatpush1.bf16.msra.mxu0 %v297
        %320 = vmatprep.subr.bf16.mxu0 0
        %321 = vmatpush1.bf16.msra.mxu0 %v298
        %322 = vmatprep.subr.bf16.mxu0 0
        %323 = vmatpush1.bf16.msra.mxu0 %v299
        %324 = vmatprep.subr.bf16.mxu0 0
        %325 = vmatpush1.bf16.msra.mxu0 0
        %326 = vmatprep.subr.bf16.mxu0 0
        %327 = vmatpush1.bf16.msra.mxu0 0
        %328 = vmatprep.subr.bf16.mxu0 0
        %329 = vmatpush1.bf16.msra.mxu0 0
        %330 = vmatprep.subr.bf16.mxu0 0
        %331 = vmatpush1.bf16.msra.mxu0 0
        %332 = vmatprep.subr.bf16.mxu0 0
        %333 = vmatpush1.bf16.msra.mxu0 0
        %334 = vmatprep.subr.bf16.mxu0 0
        %335 = vmatpush1.bf16.msra.mxu0 0
        %336 = vmatprep.subr.bf16.mxu0 0
        %337 = vmatpush1.bf16.msra.mxu0 0
        %338 = vmatprep.subr.bf16.mxu0 0
        %339 = vmatpush1.bf16.msra.mxu0 0
        %340 = vmatprep.mubr.bf16.mxu0 0
        %341 = vmatmul.mubr.bf16.gmra.mrb[0].mxu0 %v244
        %v342 = vpop.f32.mrb[0].mxu0
        %v343 = vadd.f32 0.0, %v342
        %v344 = vpop.f32.mrb[0].mxu0
        %v345 = vpop.f32.mrb[0].mxu0
        %v346 = vadd.f32 0.0, %v345
        %v347 = vpop.f32.mrb[0].mxu0
        %348 = vmatprep.mubr.bf16.mxu0 0
        %349 = vmatmul.mubr.bf16.gmra.mrb[0].mxu0 %v245
        %v350 = vpop.f32.mrb[0].mxu0
        %v351 = vadd.f32 0.0, %v350
        %v352 = vpop.f32.mrb[0].mxu0
        %v353 = vpop.f32.mrb[0].mxu0
        %v354 = vadd.f32 0.0, %v353
        %v355 = vpop.f32.mrb[0].mxu0
        %356 = vmatprep.mubr.bf16.mxu0 0
        %357 = vmatmul.mubr.bf16.gmra.mrb[0].mxu0 %v246
        %v358 = vpop.f32.mrb[0].mxu0
        %v359 = vadd.f32 0.0, %v358
        %v360 = vpop.f32.mrb[0].mxu0
        %v361 = vpop.f32.mrb[0].mxu0
        %v362 = vadd.f32 0.0, %v361
        %v363 = vpop.f32.mrb[0].mxu0
        %364 = vmatprep.mubr.bf16.mxu0 0
        %365 = vmatmul.mubr.bf16.gmra.mrb[0].mxu0 %v247
        %v366 = vpop.f32.mrb[0].mxu0
        %v367 = vadd.f32 0.0, %v366
        %v368 = vpop.f32.mrb[0].mxu0
        %v369 = vpop.f32.mrb[0].mxu0
        %v370 = vadd.f32 0.0, %v369
        %v371 = vpop.f32.mrb[0].mxu0
        %372 = vmatprep.mubr.bf16.mxu0 0
        %373 = vmatmul.mubr.bf16.gmra.mrb[0].mxu0 %v248
        %v374 = vpop.f32.mrb[0].mxu0
        %v375 = vadd.f32 0.0, %v374
        %v376 = vpop.f32.mrb[0].mxu0
        %v377 = vpop.f32.mrb[0].mxu0
        %v378 = vadd.f32 0.0, %v377
        %v379 = vpop.f32.mrb[0].mxu0
        %380 = vmatprep.mubr.bf16.mxu0 0
        %381 = vmatmul.mubr.bf16.gmra.mrb[0].mxu0 %v249
        %v382 = vpop.f32.mrb[0].mxu0
        %v383 = vadd.f32 0.0, %v382
        %v384 = vpop.f32.mrb[0].mxu0
        %v385 = vpop.f32.mrb[0].mxu0
        %v386 = vadd.f32 0.0, %v385
        %v387 = vpop.f32.mrb[0].mxu0
        %388 = vmatprep.mubr.bf16.mxu0 0
        %389 = vmatmul.mubr.bf16.gmra.mrb[0].mxu0 %v250
        %v390 = vpop.f32.mrb[0].mxu0
        %v391 = vadd.f32 0.0, %v390
        %v392 = vpop.f32.mrb[0].mxu0
        %v393 = vpop.f32.mrb[0].mxu0
        %v394 = vadd.f32 0.0, %v393
        %v395 = vpop.f32.mrb[0].mxu0
        %396 = vmatprep.mubr.bf16.mxu0 0
        %397 = vmatmul.mubr.bf16.gmra.mrb[0].mxu0 %v251
        %v398 = vpop.f32.mrb[0].mxu0
        %v399 = vadd.f32 0.0, %v398
        %v400 = vpop.f32.mrb[0].mxu0
        %v401 = vpop.f32.mrb[0].mxu0
        %v402 = vadd.f32 0.0, %v401
        %v403 = vpop.f32.mrb[0].mxu0
        %404 = vdwg.mxu0
        %v405 = vpack.c.bf16 %v346, %v343
        %v406 = vpack.c.bf16 %v354, %v351
        %v407 = vpack.c.bf16 %v362, %v359
        %v408 = vpack.c.bf16 %v370, %v367
        %v409 = vpack.c.bf16 %v378, %v375
        %v410 = vpack.c.bf16 %v386, %v383
        %v411 = vpack.c.bf16 %v394, %v391
        %v412 = vpack.c.bf16 %v402, %v399
        %v421 = vunpack.c.l.b16 %v405
        %v422 = vunpack.c.h.b16 %v405
        %v423 = vunpack.c.l.b16 %v406
        %v424 = vunpack.c.h.b16 %v406
        %v425 = vunpack.c.l.b16 %v407
        %v426 = vunpack.c.h.b16 %v407
        %v427 = vunpack.c.l.b16 %v408
        %v428 = vunpack.c.h.b16 %v408
        %v429 = vunpack.c.l.b16 %v409
        %v430 = vunpack.c.h.b16 %v409
        %v431 = vunpack.c.l.b16 %v410
        %v432 = vunpack.c.h.b16 %v410
        %v433 = vunpack.c.l.b16 %v411
        %v434 = vunpack.c.h.b16 %v411
        %v435 = vunpack.c.l.b16 %v412
        %v436 = vunpack.c.h.b16 %v412
        %v437 = vpack.c.b16 %v421, %v421
        %v438 = vpack.c.b16 %v422, %v422
        %v439 = vpack.c.b16 %v423, %v423
        %v440 = vpack.c.b16 %v424, %v424
        %v441 = vpack.c.b16 %v425, %v425
        %v442 = vpack.c.b16 %v426, %v426
        %v443 = vpack.c.b16 %v427, %v427
        %v444 = vpack.c.b16 %v428, %v428
        %v445 = vpack.c.b16 %v429, %v429
        %v446 = vpack.c.b16 %v430, %v430
        %v447 = vpack.c.b16 %v431, %v431
        %v448 = vpack.c.b16 %v432, %v432
        %v449 = vpack.c.b16 %v433, %v433
        %v450 = vpack.c.b16 %v434, %v434
        %v451 = vpack.c.b16 %v435, %v435
        %v452 = vpack.c.b16 %v436, %v436
        %469 = vst [vmem:[%s176] sm:$0xf] %v437
        %470 = vst [vmem:[%s176 + $0x4] sm:$0xf] %v438
        %471 = vst [vmem:[%s176 + $0x8] sm:$0xf] %v439
        %472 = vst [vmem:[%s176 + $0xc] sm:$0xf] %v440
        %473 = vst [vmem:[%s176 + $0x10] sm:$0xf] %v441
        %474 = vst [vmem:[%s176 + $0x14] sm:$0xf] %v442
        %475 = vst [vmem:[%s176 + $0x18] sm:$0xf] %v443
        %476 = vst [vmem:[%s176 + $0x1c] sm:$0xf] %v444
        %477 = vst [vmem:[%s176 + $0x20] sm:$0xf] %v445
        %478 = vst [vmem:[%s176 + $0x24] sm:$0xf] %v446
        %479 = vst [vmem:[%s176 + $0x28] sm:$0xf] %v447
        %480 = vst [vmem:[%s176 + $0x2c] sm:$0xf] %v448
        %481 = vst [vmem:[%s176 + $0x30] sm:$0xf] %v449
        %482 = vst [vmem:[%s176 + $0x34] sm:$0xf] %v450
        %483 = vst [vmem:[%s176 + $0x38] sm:$0xf] %v451
        %484 = vst [vmem:[%s176 + $0x3c] sm:$0xf] %v452
        %s485 = sand.u32 %s75, 1
        %s486 = scalar_lea.sflag [#allocation4], %s485
        %s487 = sand.u32 %s75, 1
        %s488 = smul.addr %s487, 64
        %s489 = scalar_lea.vmem [#allocation7], %s488
        // Predicated region
        $region37: #{tpu_custom_call.1} parent=27 // pred_check
          %p490 = pneg %p85
        $region38: #{tpu_custom_call.1} parent=27 // pred_check_branch
          %492 = sbr.rel (%p490) target = $region40
        $region39: #{tpu_custom_call.1} parent=27 // pred_region
          %s493 = smul.u32 16, %s20
          %s495 = ssub.s32 1024, 1024
          %496 = vsyncadd %s486, %s495
          %s497 = smul.addr %s493, 64
          %s498 = scalar_lea.hbm %s2, %s497
          %s499 = sshll.u32 %s489, 4
          %s500 = int_to_ptr.vmem [resolvable:$true] %s499
          %505 = dma.vmem_to_hbm [thread:$0]  %s500, 1024, %s498, %s486, 64, 64, 4
        $region40: #{tpu_custom_call.1} parent=27 // pred_fallthru
          _
      $region28: #{tpu_custom_call.1} parent=5 // pred_fallthru
        _
      %p506 = scmp.le.s32.totalorder 2, %s15
      // Predicated region
      $region41: #{tpu_custom_call.1} parent=5 // pred_check
        %p507 = pneg %p506
      $region42: #{tpu_custom_call.1} parent=5 // pred_check_branch
        %509 = sbr.rel (%p507) target = $region44
      $region43: #{tpu_custom_call.1} parent=5 // pred_region
        %s510 = ssub.s32 %s15, 2
        // Predicated region
        $region45: #{tpu_custom_call.1} parent=43 // pred_check
          %p511 = pneg %p91
        $region46: #{tpu_custom_call.1} parent=43 // pred_check_branch
          %513 = sbr.rel (%p511) target = $region48
        $region47: #{tpu_custom_call.1} parent=43 // pred_region
          %s514 = sand.u32 %s76, 1
          %s515 = scalar_lea.sflag [#allocation4], %s514
          %s516 = sand.u32 %s76, 1
          %s517 = smul.addr %s516, 64
          %s518 = scalar_lea.vmem [#allocation7], %s517
          %519 = dma.done %s515, 1024
        $region48: #{tpu_custom_call.1} parent=43 // pred_fallthru
          _
      $region44: #{tpu_custom_call.1} parent=5 // pred_fallthru
        _
    $region6: #{tpu_custom_call.1} parent=1 // loop_footer
      %s19 = sadd.s32 1, %s15
    $region7: #{tpu_custom_call.1} parent=1 // loop_footer_branch
      %14 = sbr.rel target = $region3
    $region8: #{tpu_custom_call.1} parent=1 // loop_exit
      _
    %520 = vsyncpa [#allocation3], 1
    %s521 = scalar_lea.sflag [#allocation3], 1
    %522 = vsyncpa %s521, 1
    %523 = vsyncpa [#allocation6], 1
    %524 = vsyncpa [#allocation4], 1
    %s525 = scalar_lea.sflag [#allocation4], 1
    %526 = vsyncpa %s525, 1

</llo_original>
